<compile_context>
chip_gen: v6e
topology: v6e:2x2x1
jax: 0.10.0
libtpu: 0.0.40
codegen_flags: <defaults>
</compile_context>

<pallas_src>
import functools

import jax
import jax.numpy as jnp
from jax.experimental import pallas as pl
from jax.experimental.pallas import tpu as pltpu


# ---------------------------------------------------------------------------
# Kernels
# ---------------------------------------------------------------------------

def _single_step_kernel(x_ref, w_ref, b_ref, o_ref, *, bias_scale):
    """Whole contraction fits one grid step: no scratch accumulator needed."""
    b = b_ref[...]
    if bias_scale != 1.0:
        b = b * bias_scale
    o_ref[...] = (jnp.dot(x_ref[...], w_ref[...],
                          preferred_element_type=jnp.float32) + b).astype(o_ref.dtype)


def _acc_kernel(x_ref, w_ref, b_ref, o_ref, acc_ref, *, red_axes, bias_scale):
    """Accumulate over one or more trailing reduction grid axes."""
    first = pl.program_id(red_axes[0]) == 0
    last = pl.program_id(red_axes[0]) == pl.num_programs(red_axes[0]) - 1
    for ax in red_axes[1:]:
        first = jnp.logical_and(first, pl.program_id(ax) == 0)
        last = jnp.logical_and(last, pl.program_id(ax) == pl.num_programs(ax) - 1)

    @pl.when(first)
    def _():
        acc_ref[...] = jnp.zeros_like(acc_ref)

    acc_ref[...] += jnp.dot(x_ref[...], w_ref[...],
                            preferred_element_type=jnp.float32)

    @pl.when(last)
    def _():
        b = b_ref[...]
        if bias_scale != 1.0:
            b = b * bias_scale
        o_ref[...] = (acc_ref[...] + b).astype(o_ref.dtype)


# ---------------------------------------------------------------------------
# Tiling / budgeting helpers
# ---------------------------------------------------------------------------

def _round_up(x, m):
    return ((x + m - 1) // m) * m


def _pick_tile(dim, preferred, align):
    """Return (tile, padded_dim).

    * dim <= preferred: one full-dim block (allowed by Mosaic regardless of
      alignment), no padding.
    * else: largest align-multiple <= preferred that divides dim; if none exists,
      pad dim up so a preferred-sized aligned tile divides it (never a monolithic
      block that could exceed the VMEM budget).
    """
    if dim <= preferred:
        return dim, dim
    t = (preferred // align) * align
    tt = t
    while tt >= align:
        if dim % tt == 0:
            return tt, dim
        tt -= align
    return t, _round_up(dim, t)


def _sublane_align(dtype):
    itemsize = jnp.dtype(dtype).itemsize
    return max(8, 32 // itemsize)  # 8 f32 / 16 bf16 / 32 int8-fp8


def _vmem_capacity_bytes():
    try:
        cap = getattr(pltpu.get_tpu_info(), "vmem_capacity_bytes", None)
        if cap:
            return int(cap)
    except Exception:
        pass
    return 64 << 20  # conservative: v7x per-TC VMEM


def _split_parallel(tn, tm, N_pad, M_pad, n_align, extra=1):
    """Guarantee >=2 blocks on the parallel grid axes (keeps both v7x TCs busy)."""
    if extra * (N_pad // tn) * (M_pad // tm) >= 2:
        return tn, tm
    half_tm = tm // 2
    if half_tm >= 128 and half_tm % 128 == 0 and M_pad % half_tm == 0:
        return tn, half_tm
    half_tn = tn // 2
    if half_tn >= n_align and half_tn % n_align == 0 and N_pad % half_tn == 0:
        return half_tn, tm
    return tn, tm


# ---------------------------------------------------------------------------
# Wrapper
# ---------------------------------------------------------------------------

def orthonormal_aligner(x, weights, bias, *, reduce=True,
                        tn_pref=512, tm_pref=512, tk_pref=1024,
                        out_dtype=jnp.float32):
    """out = x @ weights + bias / len(x); optionally summed over dim 0 (heads)."""
    H, N, C = x.shape
    Hw, Cw, M = weights.shape
    assert Hw == H and Cw == C, "weight stack must match x"
    assert bias.shape == (M,), "bias broadcast requires clip_dim == model_dim"

    x_bytes = jnp.dtype(x.dtype).itemsize
    w_bytes = jnp.dtype(weights.dtype).itemsize
    out_bytes = jnp.dtype(out_dtype).itemsize

    n_align = _sublane_align(x.dtype)
    if N % n_align != 0 and N % 8 == 0:
        n_align = 8  # avoid a pad pass when the batch is already 8-aligned

    cap = _vmem_capacity_bytes()
    clamp = (cap * 3) // 4
    M128 = _round_up(M, 128)  # lane-dense output stores

    # Tile selection under the VMEM budget (shrink preferences if necessary).
    while True:
        tn, N_pad = _pick_tile(N, tn_pref, n_align)
        tm, M_pad = _pick_tile(M128, tm_pref, 128)
        tk, C_pad = _pick_tile(C, tk_pref, 128)
        need = (2 * tn * tk * x_bytes        # x tile, double-buffered
                + 2 * tk * tm * w_bytes      # weight tile, double-buffered
                + 2 * tn * tm * out_bytes    # output tile, double-buffered
                + tn * tm * 4                # f32 accumulator scratch
                + 2 * 8 * tm * 4)            # bias tile (sublane-padded)
        if int(need * 1.25) <= clamp or (tk_pref <= 128 and tn_pref <= 128
                                         and tm_pref <= 128):
            break
        if tk_pref > 128:
            tk_pref //= 2
        elif tn_pref > 128:
            tn_pref //= 2
        else:
            tm_pref //= 2
    vmem_limit = int(min(max(need * 1.25, 4 << 20), clamp))

    # v7x: make sure both TensorCores get at least one parallel block each.
    tn, tm = _split_parallel(tn, tm, N_pad, M_pad, n_align,
                             extra=(1 if reduce else H))

    # Zero-pad inputs only when a dim was padded (no-op for aligned shapes).
    if N_pad != N or C_pad != C:
        x = jnp.pad(x, ((0, 0), (0, N_pad - N), (0, C_pad - C)))
    if C_pad != C or M_pad != M:
        weights = jnp.pad(weights, ((0, 0), (0, C_pad - C), (0, M_pad - M)))
    bias2d = bias.reshape(1, M).astype(jnp.float32)
    if M_pad != M:
        bias2d = jnp.pad(bias2d, ((0, 0), (0, M_pad - M)))

    nk = C_pad // tk

    if reduce:
        # sum_h x[h] @ W[h]: heads fold into the reduction as a grid axis —
        # no wrapper transpose, x streams from HBM in its native layout.
        grid = (N_pad // tn, M_pad // tm, H, nk)
        x_spec = pl.BlockSpec((None, tn, tk), lambda i, j, h, k: (h, i, k))
        w_spec = pl.BlockSpec((None, tk, tm), lambda i, j, h, k: (h, k, j))
        b_spec = pl.BlockSpec((1, tm), lambda i, j, h, k: (0, j))
        o_spec = pl.BlockSpec((tn, tm), lambda i, j, h, k: (i, j))
        out_shape = jax.ShapeDtypeStruct((N_pad, M_pad), out_dtype)
        dims = ("parallel", "parallel", "arbitrary", "arbitrary")
        red_axes = (2, 3)
        bias_scale = 1.0          # H * (bias / H)
        n_red = H * nk
    else:
        grid = (H, N_pad // tn, M_pad // tm, nk)
        x_spec = pl.BlockSpec((None, tn, tk), lambda h, i, j, k: (h, i, k))
        w_spec = pl.BlockSpec((None, tk, tm), lambda h, i, j, k: (h, k, j))
        b_spec = pl.BlockSpec((1, tm), lambda h, i, j, k: (0, j))
        o_spec = pl.BlockSpec((None, tn, tm), lambda h, i, j, k: (h, i, j))
        out_shape = jax.ShapeDtypeStruct((H, N_pad, M_pad), out_dtype)
        dims = ("parallel", "parallel", "parallel", "arbitrary")
        red_axes = (3,)
        bias_scale = 1.0 / H
        n_red = nk

    if n_red == 1:
        kernel = functools.partial(_single_step_kernel, bias_scale=bias_scale)
        scratch = []
    else:
        kernel = functools.partial(_acc_kernel, red_axes=red_axes,
                                   bias_scale=bias_scale)
        scratch = [pltpu.VMEM((tn, tm), jnp.float32)]

    out = pl.pallas_call(
        kernel,
        out_shape=out_shape,
        grid_spec=pltpu.PrefetchScalarGridSpec(
            num_scalar_prefetch=0,
            grid=grid,
            in_specs=[x_spec, w_spec, b_spec],
            out_specs=o_spec,
            scratch_shapes=scratch,
        ),
        compiler_params=pltpu.CompilerParams(
            dimension_semantics=dims,
            vmem_limit_bytes=vmem_limit,
        ),
    )(x, weights, bias2d)

    if reduce:
        if N_pad != N or M_pad != M:
            out = out[:N, :M]
        return out
    if N_pad != N or M_pad != M:
        out = out[:, :N, :M]
    return out


# ---------------------------------------------------------------------------
# Parameter construction mirroring OrthonormalAligner.__init__
# ---------------------------------------------------------------------------

def make_params(key, num_heads, model_dim, clip_dim):
    """Deterministic synthetic parameters (orthonormal weights via batched QR)."""
    kw, kb = jax.random.split(key)
    raw = jax.random.normal(kw, (num_heads, clip_dim, model_dim), dtype=jnp.float32)
    # TODO(synk): torch's orthogonal() parametrization (re-orthogonalized every
    # forward) is a parameter construction, emulated once here via QR.
    q, _ = jnp.linalg.qr(raw)
    weights = q  # (num_heads, clip_dim, model_dim), orthonormal rows/cols
    bias = jax.random.normal(kb, (clip_dim,), dtype=jnp.float32) * 0.02
    return weights, bias


if __name__ == "__main__":
    num_heads, batch = 4, 8
    model_dim = clip_dim = 32  # square aligner (required by the reference broadcast)

    key = jax.random.PRNGKey(0)
    kx, kp = jax.random.split(key)

    # bf16 activations/weights (no f32 upcast in the wrapper; f32 MXU accumulate).
    x = jax.random.normal(kx, (num_heads, batch, clip_dim), dtype=jnp.float32)
    x = x.astype(jnp.bfloat16)
    weights, bias = make_params(kp, num_heads, model_dim, clip_dim)
    weights = weights.astype(jnp.bfloat16)

    # pure-JAX reference of the exact PyTorch forward (on the same bf16 values)
    xf = x.astype(jnp.float32)
    wf = weights.astype(jnp.float32)
    ref_full = jnp.matmul(xf, wf) + bias / x.shape[0]

    # reduce=True path (exercises the multi-step accumulator over the head axis)
    out = jax.block_until_ready(orthonormal_aligner(x, weights, bias, reduce=True))
    ref = ref_full.sum(0)
    assert out.shape == (batch, model_dim)
    assert jnp.allclose(out, ref, atol=2e-2, rtol=2e-2), \
        float(jnp.max(jnp.abs(out - ref)))

    # reduce=False path (exercises the single-step, no-scratch kernel)
    out_nr = jax.block_until_ready(orthonormal_aligner(x, weights, bias, reduce=False))
    assert out_nr.shape == (num_heads, batch, model_dim)
    assert jnp.allclose(out_nr, ref_full, atol=2e-2, rtol=2e-2), \
        float(jnp.max(jnp.abs(out_nr - ref_full)))

    print("KERNEL_OK")
</pallas_src>

<mosaic_0001>
module attributes {stable_mosaic.version = 11 : i64} {
  func.func @_acc_kernel(%arg0: i32, %arg1: i32, %arg2: i32, %arg3: i32, %arg4: memref<1x8x32xbf16, #tpu.memory_space<vmem>>, %arg5: memref<1x32x128xbf16, #tpu.memory_space<vmem>>, %arg6: memref<1x128xf32, #tpu.memory_space<vmem>>, %arg7: memref<8x128xf32, #tpu.memory_space<vmem>>, %arg8: memref<8x128xf32, #tpu.memory_space<vmem>>) attributes {dimension_semantics = [#tpu.dimension_semantics<parallel>, #tpu.dimension_semantics<parallel>, #tpu.dimension_semantics<arbitrary>, #tpu.dimension_semantics<arbitrary>], iteration_bounds = array<i64: 1, 1, 4, 1>, scalar_prefetch = 0 : i64, scratch_operands = 1 : i64, tpu.core_type = #tpu.core_type<tc>, window_params = [{transform_indices = @transform_0, window_bounds = array<i64: 1, 8, 32>}, {transform_indices = @transform_1, window_bounds = array<i64: 1, 32, 128>}, {transform_indices = @transform_2, window_bounds = array<i64: 1, 128>}, {transform_indices = @transform_3, window_bounds = array<i64: 8, 128>}]} {
    %c0_i32 = arith.constant 0 : i32
    %0 = arith.cmpi eq, %arg2, %c0_i32 : i32
    %c3_i32 = arith.constant 3 : i32
    %1 = arith.cmpi eq, %arg2, %c3_i32 : i32
    %c0_i32_0 = arith.constant 0 : i32
    %2 = arith.cmpi eq, %arg3, %c0_i32_0 : i32
    %3 = arith.andi %0, %2 : i1
    %c0_i32_1 = arith.constant 0 : i32
    %4 = arith.cmpi eq, %arg3, %c0_i32_1 : i32
    %5 = arith.andi %1, %4 : i1
    %6 = arith.extui %3 : i1 to i32
    %c0_i32_2 = arith.constant 0 : i32
    %7 = arith.cmpi ne, %6, %c0_i32_2 : i32
    scf.if %7 {
      %cst_13 = arith.constant 0.000000e+00 : f32
      %18 = vector.broadcast %cst_13 : f32 to vector<8x128xf32>
      %c0_14 = arith.constant 0 : index
      %c0_15 = arith.constant 0 : index
      %19 = vector.load %arg8[%c0_14, %c0_15] : memref<8x128xf32, #tpu.memory_space<vmem>>, vector<8x128xf32>
      tpu.vector_store %arg8[%c0_14, %c0_15], %18 {strides = array<i32>} : memref<8x128xf32, #tpu.memory_space<vmem>>, vector<8x128xf32>,
    } else {
    }
    %c0 = arith.constant 0 : index
    %c0_3 = arith.constant 0 : index
    %8 = vector.load %arg8[%c0, %c0_3] : memref<8x128xf32, #tpu.memory_space<vmem>>, vector<8x128xf32>
    %c0_4 = arith.constant 0 : index
    %c0_5 = arith.constant 0 : index
    %c0_6 = arith.constant 0 : index
    %9 = vector.load %arg4[%c0_4, %c0_5, %c0_6] : memref<1x8x32xbf16, #tpu.memory_space<vmem>>, vector<1x8x32xbf16>
    %10 = vector.shape_cast %9 : vector<1x8x32xbf16> to vector<8x32xbf16>
    %c0_7 = arith.constant 0 : index
    %c0_8 = arith.constant 0 : index
    %c0_9 = arith.constant 0 : index
    %11 = vector.load %arg5[%c0_7, %c0_8, %c0_9] : memref<1x32x128xbf16, #tpu.memory_space<vmem>>, vector<1x32x128xbf16>
    %12 = vector.shape_cast %11 : vector<1x32x128xbf16> to vector<32x128xbf16>
    %cst = arith.constant dense<0.000000e+00> : vector<8x128xf32>
    %13 = tpu.matmul %10, %12, %cst {dimension_numbers = #tpu.dot_dimension_numbers<[1], [0], [0], [1], [0, 0, 1, 1], [], []>} : vector<8x32xbf16>, vector<32x128xbf16>, vector<8x128xf32> -> vector<8x128xf32>
    %14 = arith.addf %8, %13 : vector<8x128xf32>
    %c0_10 = arith.constant 0 : index
    %c0_11 = arith.constant 0 : index
    %15 = vector.load %arg8[%c0_10, %c0_11] : memref<8x128xf32, #tpu.memory_space<vmem>>, vector<8x128xf32>
    tpu.vector_store %arg8[%c0_10, %c0_11], %14 {strides = array<i32>} : memref<8x128xf32, #tpu.memory_space<vmem>>, vector<8x128xf32>,
    %16 = arith.extui %5 : i1 to i32
    %c0_i32_12 = arith.constant 0 : i32
    %17 = arith.cmpi ne, %16, %c0_i32_12 : i32
    scf.if %17 {
      %c0_13 = arith.constant 0 : index
      %c0_14 = arith.constant 0 : index
      %18 = vector.load %arg6[%c0_13, %c0_14] : memref<1x128xf32, #tpu.memory_space<vmem>>, vector<1x128xf32>
      %c0_15 = arith.constant 0 : index
      %c0_16 = arith.constant 0 : index
      %19 = vector.load %arg8[%c0_15, %c0_16] : memref<8x128xf32, #tpu.memory_space<vmem>>, vector<8x128xf32>
      %20 = vector.broadcast %18 : vector<1x128xf32> to vector<8x128xf32>
      %21 = arith.addf %19, %20 : vector<8x128xf32>
      %c0_17 = arith.constant 0 : index
      %c0_18 = arith.constant 0 : index
      %22 = vector.load %arg7[%c0_17, %c0_18] : memref<8x128xf32, #tpu.memory_space<vmem>>, vector<8x128xf32>
      tpu.vector_store %arg7[%c0_17, %c0_18], %21 {strides = array<i32>} : memref<8x128xf32, #tpu.memory_space<vmem>>, vector<8x128xf32>,
    } else {
    }
    return
  }
  func.func @transform_0(%arg0: i32, %arg1: i32, %arg2: i32, %arg3: i32) -> (i32, i32, i32) {
    %c0_i32 = arith.constant 0 : i32
    return %arg2, %arg0, %arg3 : i32, i32, i32
  }
  func.func @transform_1(%arg0: i32, %arg1: i32, %arg2: i32, %arg3: i32) -> (i32, i32, i32) {
    %c0_i32 = arith.constant 0 : i32
    return %arg2, %arg3, %arg1 : i32, i32, i32
  }
  func.func @transform_2(%arg0: i32, %arg1: i32, %arg2: i32, %arg3: i32) -> (i32, i32) {
    %c0_i32 = arith.constant 0 : i32
    %c0_i32_0 = arith.constant 0 : i32
    return %c0_i32, %arg1 : i32, i32
  }
  func.func @transform_3(%arg0: i32, %arg1: i32, %arg2: i32, %arg3: i32) -> (i32, i32) {
    %c0_i32 = arith.constant 0 : i32
    return %arg0, %arg1 : i32, i32
  }
}

</mosaic_0001>

<llo_original>
// kernel: tpu_custom_call.1
$region0: #{tpu_custom_call.1}
  #allocation0 [shape = 'u32[]', space=smem, size = 0x4, offset = 0x4, fixed_abs, tag = 'smem constant byte address 0x4 - core index']
  #allocation1 [shape = 'u32[144,128]{1,0:T(1,128)}', space=vmem, size = 0x12000, scoped, tag = 'internal scratch']
  #allocation2 [shape = 'f32[8,128]{1,0:T(8,128)}', space=vmem, size = 0x1000, scoped, tag = 'scratch operand']
  %s0 = inlined_call_operand.hbm [shape: bf16[4,8,32], index: 0, kind: input, shape index: {}]
  %s1 = inlined_call_operand.hbm [shape: bf16[4,32,128], index: 1, kind: input, shape index: {}]
  %s2 = inlined_call_operand.vmem [shape: f32[1,128], index: 2, kind: input, shape index: {}]
  %s3 = inlined_call_operand.hbm [shape: f32[8,128], index: 3, kind: output, shape index: {}]
  %s4 = sld [smem:[#allocation0]]
  $region61: #{tpu_custom_call.1} parent=0
    _
  %s6 = ssub.s32 1, %s4
  %s7 = scalar_select 0, %s6, %s4
  $region1: #{tpu_custom_call.1} parent=0
    #allocation3 [shape = 'u8[4096]{0}', space=vmem, size = 0x1000, scoped, tag = 'input window, operand 0']
    #allocation4 [shape = 's32[2]{0}', space=sflag, size = 0x8, scoped, tag = 'scoped memory for tpu_custom_call.1']
    #allocation5 [shape = 's32[2]{0}', space=sflag, size = 0x8, scoped, tag = 'scoped memory for tpu_custom_call.1']
    #allocation6 [shape = 'u8[16384]{0}', space=vmem, size = 0x4000, scoped, tag = 'input window, operand 1']
    #allocation7 [shape = 's32[2]{0}', space=sflag, size = 0x8, scoped, tag = 'scoped memory for tpu_custom_call.1']
    #allocation8 [shape = 'u8[4096]{0}', space=vmem, size = 0x1000, scoped, tag = 'output window, operand 0, single buffered']
    %8 = vsyncpa [#allocation4], 0
    %s9 = scalar_lea.sflag [#allocation4], 1
    %10 = vsyncpa %s9, 0
    %11 = vsyncpa [#allocation7], 0
    %s12 = scalar_lea.sflag [#allocation7], 1
    %13 = vsyncpa %s12, 0
    %14 = vsyncpa [#allocation5], 0
    loop: start=0, step=1, limit=6
    $region2: #{tpu_custom_call.1} parent=1 // loop_pre_header
      _
    $region3: #{tpu_custom_call.1} parent=1 // loop_header
      %s16 = sphi 0, %s20
      %p17 = scmp.ge.s32.totalorder %s16, 6
      %s23 = sphi 0, %s49
      %s24 = sphi 0, %s45
      %s25 = sphi 0, %s41
      %s26 = sphi 0, %s37
      %s27 = sphi 0, %s23
      %s28 = sphi 0, %s24
      %s29 = sphi 0, %s25
      %s30 = sphi 0, %s26
      %s31 = sphi 0, %s27
      %s32 = sphi 0, %s28
      %s33 = sphi 0, %s29
      %s34 = sphi 0, %s30
      %s56 = sphi 0, %s58
      %s59 = sphi 0, %s56
      %s60 = sphi 0, %s59
      %s76 = sphi 0, %s60
      %s86 = sphi 0, %s88
      %s89 = sphi 0, %s86
      %s90 = sphi 0, %s89
      %s106 = sphi 0, %s90
      %s112 = sphi 0, %s114
      %s115 = sphi 0, %s112
      %s116 = sphi 0, %s115
      %s132 = sphi 0, %s116
      %s140 = sphi 0, %s142
      %s143 = sphi 0, %s140
      %s144 = sphi 0, %s143
      %s160 = sphi 0, %s144
    $region4: #{tpu_custom_call.1} parent=1 // loop_header_branch
      %19 = sbr.rel (%p17) target = $region8
    $region5: #{tpu_custom_call.1} parent=1 // loop_body
      %s21 = ssub.s32 %s16, 1
      %s22 = ssub.s32 %s16, 2
      %s35 = sadd.s32 1, %s26
      %p36 = scmp.ge.s32.totalorder %s35, 1
      %s37 = scalar_select %p36, 0, %s35
      %s38 = sadd.s32 1, %s25
      %s39 = scalar_select %p36, %s38, %s25
      %p40 = scmp.ge.s32.totalorder %s39, 4
      %s41 = scalar_select %p40, 0, %s39
      %s42 = sadd.s32 1, %s24
      %s43 = scalar_select %p40, %s42, %s24
      %p44 = scmp.ge.s32.totalorder %s43, 1
      %s45 = scalar_select %p44, 0, %s43
      %s46 = sadd.s32 1, %s23
      %s47 = scalar_select %p44, %s46, %s23
      %p48 = scmp.ge.s32.totalorder %s47, 1
      %s49 = scalar_select %p48, 0, %s47
      %s50 = ssub.s32 %s25, %s41
      %s51 = ssub.s32 %s23, %s49
      %s52 = sor.u32 %s50, %s51
      %s53 = ssub.s32 %s26, %s37
      %s54 = sor.u32 %s52, %s53
      %p55 = scmp.eq.s32.totalorder %s54, 0
      %s57 = sadd.s32 %s56, 1
      %s58 = scalar_select %p55, %s56, %s57
      %p61 = pneg %p55
      %p62 = scmp.eq.s32.totalorder %s16, 3
      %p63 = por %p61, %p62
      %p64 = scmp.ne.s32.totalorder %s56, %s59
      %p65 = scmp.eq.s32.totalorder %s16, 0
      %p66 = por %p64, %p65
      %p67 = scmp.ne.s32.totalorder %s56, %s59
      %p68 = scmp.eq.s32.totalorder %s21, 3
      %p69 = por %p67, %p68
      %p70 = scmp.ne.s32.totalorder %s59, %s60
      %p71 = scmp.eq.s32.totalorder %s21, 0
      %p72 = por %p70, %p71
      %p73 = scmp.ne.s32.totalorder %s59, %s60
      %p74 = scmp.eq.s32.totalorder %s22, 3
      %p75 = por %p73, %p74
      %p77 = scmp.ne.s32.totalorder %s60, %s76
      %p78 = scmp.eq.s32.totalorder %s22, 0
      %p79 = por %p77, %p78
      %s80 = ssub.s32 %s25, %s41
      %s81 = ssub.s32 %s26, %s37
      %s82 = sor.u32 %s80, %s81
      %s83 = ssub.s32 %s24, %s45
      %s84 = sor.u32 %s82, %s83
      %p85 = scmp.eq.s32.totalorder %s84, 0
      %s87 = sadd.s32 %s86, 1
      %s88 = scalar_select %p85, %s86, %s87
      %p91 = pneg %p85
      %p92 = scmp.eq.s32.totalorder %s16, 3
      %p93 = por %p91, %p92
      %p94 = scmp.ne.s32.totalorder %s86, %s89
      %p95 = scmp.eq.s32.totalorder %s16, 0
      %p96 = por %p94, %p95
      %p97 = scmp.ne.s32.totalorder %s86, %s89
      %p98 = scmp.eq.s32.totalorder %s21, 3
      %p99 = por %p97, %p98
      %p100 = scmp.ne.s32.totalorder %s89, %s90
      %p101 = scmp.eq.s32.totalorder %s21, 0
      %p102 = por %p100, %p101
      %p103 = scmp.ne.s32.totalorder %s89, %s90
      %p104 = scmp.eq.s32.totalorder %s22, 3
      %p105 = por %p103, %p104
      %p107 = scmp.ne.s32.totalorder %s90, %s106
      %p108 = scmp.eq.s32.totalorder %s22, 0
      %p109 = por %p107, %p108
      %s110 = ssub.s32 %s24, %s45
      %p111 = scmp.eq.s32.totalorder %s110, 0
      %s113 = sadd.s32 %s112, 1
      %s114 = scalar_select %p111, %s112, %s113
      %p117 = pneg %p111
      %p118 = scmp.eq.s32.totalorder %s16, 3
      %p119 = por %p117, %p118
      %p120 = scmp.ne.s32.totalorder %s112, %s115
      %p121 = scmp.eq.s32.totalorder %s16, 0
      %p122 = por %p120, %p121
      %p123 = scmp.ne.s32.totalorder %s112, %s115
      %p124 = scmp.eq.s32.totalorder %s21, 3
      %p125 = por %p123, %p124
      %p126 = scmp.ne.s32.totalorder %s115, %s116
      %p127 = scmp.eq.s32.totalorder %s21, 0
      %p128 = por %p126, %p127
      %p129 = scmp.ne.s32.totalorder %s115, %s116
      %p130 = scmp.eq.s32.totalorder %s22, 3
      %p131 = por %p129, %p130
      %p133 = scmp.ne.s32.totalorder %s116, %s132
      %p134 = scmp.eq.s32.totalorder %s22, 0
      %p135 = por %p133, %p134
      %s136 = ssub.s32 %s23, %s49
      %s137 = ssub.s32 %s24, %s45
      %s138 = sor.u32 %s136, %s137
      %p139 = scmp.eq.s32.totalorder %s138, 0
      %s141 = sadd.s32 %s140, 1
      %s142 = scalar_select %p139, %s140, %s141
      %p145 = pneg %p139
      %p146 = scmp.eq.s32.totalorder %s16, 3
      %p147 = por %p145, %p146
      %p148 = scmp.ne.s32.totalorder %s140, %s143
      %p149 = scmp.eq.s32.totalorder %s16, 0
      %p150 = por %p148, %p149
      %p151 = scmp.ne.s32.totalorder %s140, %s143
      %p152 = scmp.eq.s32.totalorder %s21, 3
      %p153 = por %p151, %p152
      %p154 = scmp.ne.s32.totalorder %s143, %s144
      %p155 = scmp.eq.s32.totalorder %s21, 0
      %p156 = por %p154, %p155
      %p157 = scmp.ne.s32.totalorder %s143, %s144
      %p158 = scmp.eq.s32.totalorder %s22, 3
      %p159 = por %p157, %p158
      %p161 = scmp.ne.s32.totalorder %s144, %s160
      %p162 = scmp.eq.s32.totalorder %s22, 0
      %p163 = por %p161, %p162
      %p164 = scmp.le.s32.totalorder 1, %s16
      %p165 = scmp.lt.s32.totalorder %s16, 5
      %p166 = pnand %p164, %p165
      %p167 = pneg %p166
      // Predicated region
      $region9: #{tpu_custom_call.1} parent=5 // pred_check
        _
      $region10: #{tpu_custom_call.1} parent=5 // pred_check_branch
        %169 = sbr.rel (%p166) target = $region12
      $region11: #{tpu_custom_call.1} parent=5 // pred_region
        %s170 = ssub.s32 %s16, 1
        // Predicated region
        $region13: #{tpu_custom_call.1} parent=11 // pred_check
          %p171 = pneg %p128
        $region14: #{tpu_custom_call.1} parent=11 // pred_check_branch
          %173 = sbr.rel (%p171) target = $region16
        $region15: #{tpu_custom_call.1} parent=11 // pred_region
          %p174 = scmp.lt.s32.totalorder %s28, 0
          %s175 = scalar_select %p174, %s28, 0
          %s176 = scalar_lea.vmem %s2, %s175
        $region16: #{tpu_custom_call.1} parent=11 // pred_fallthru
          _
      $region12: #{tpu_custom_call.1} parent=5 // pred_fallthru
        _
      %p177 = scmp.lt.s32.totalorder %s16, 4
      // Predicated region
      $region17: #{tpu_custom_call.1} parent=5 // pred_check
        %p178 = pneg %p177
      $region18: #{tpu_custom_call.1} parent=5 // pred_check_branch
        %180 = sbr.rel (%p178) target = $region20
      $region19: #{tpu_custom_call.1} parent=5 // pred_region
        // Predicated region
        $region21: #{tpu_custom_call.1} parent=19 // pred_check
          %p181 = pneg %p66
        $region22: #{tpu_custom_call.1} parent=19 // pred_check_branch
          %183 = sbr.rel (%p181) target = $region24
        $region23: #{tpu_custom_call.1} parent=19 // pred_region
          %s184 = sand.u32 %s56, 1
          %s185 = scalar_lea.sflag [#allocation4], %s184
          %s186 = sand.u32 %s56, 1
          %s187 = smul.addr %s186, 4
          %s188 = scalar_lea.vmem [#allocation3], %s187
          %s190 = ssub.s32 64, 64
          %191 = vsyncadd %s185, %s190
          %s192 = sadd.s32 %s26, %s23
          %s193 = sadd.s32 %s192, %s25
          %s194 = smul.addr %s193, 64
          %s195 = scalar_lea.hbm %s0, %s194
          %s197 = sshll.u32 %s188, 4
          %s198 = int_to_ptr.vmem [resolvable:$true] %s197
          %200 = dma.hbm_to_vmem [thread:$0]  %s195, 64, %s198, %s185
        $region24: #{tpu_custom_call.1} parent=19 // pred_fallthru
          _
        // Predicated region
        $region25: #{tpu_custom_call.1} parent=19 // pred_check
          %p201 = pneg %p96
        $region26: #{tpu_custom_call.1} parent=19 // pred_check_branch
          %203 = sbr.rel (%p201) target = $region28
        $region27: #{tpu_custom_call.1} parent=19 // pred_region
          %s204 = sand.u32 %s86, 1
          %s205 = scalar_lea.sflag [#allocation7], %s204
          %s206 = sand.u32 %s86, 1
          %s207 = smul.addr %s206, 16
          %s208 = scalar_lea.vmem [#allocation6], %s207
          %s209 = smul.u32 4, %s26
          %s211 = ssub.s32 256, 256
          %212 = vsyncadd %s205, %s211
          %s213 = sadd.s32 %s24, %s209
          %s214 = smul.addr %s25, 4
          %s215 = sadd.s32 %s213, %s214
          %s216 = smul.addr %s215, 64
          %s217 = scalar_lea.hbm %s1, %s216
          %s218 = sshll.u32 %s208, 4
          %s219 = int_to_ptr.vmem [resolvable:$true] %s218
          %224 = dma.hbm_to_vmem [thread:$0]  %s217, 256, %s219, %s205, 64, 64, 4
        $region28: #{tpu_custom_call.1} parent=19 // pred_fallthru
          _
      $region20: #{tpu_custom_call.1} parent=5 // pred_fallthru
        _
      %p225 = scmp.le.s32.totalorder 1, %s16
      %p226 = scmp.lt.s32.totalorder %s16, 5
      %p227 = pnand %p225, %p226
      %p228 = pneg %p227
      // Predicated region
      $region29: #{tpu_custom_call.1} parent=5 // pred_check
        _
      $region30: #{tpu_custom_call.1} parent=5 // pred_check_branch
        %230 = sbr.rel (%p227) target = $region32
      $region31: #{tpu_custom_call.1} parent=5 // pred_region
        %s231 = ssub.s32 %s16, 1
        %s232 = sand.u32 %s59, 1
        %s233 = scalar_lea.sflag [#allocation4], %s232
        %s234 = sand.u32 %s59, 1
        %s235 = smul.addr %s234, 4
        %s236 = scalar_lea.vmem [#allocation3], %s235
        // Predicated region
        $region33: #{tpu_custom_call.1} parent=31 // pred_check
          %p237 = pneg %p72
        $region34: #{tpu_custom_call.1} parent=31 // pred_check_branch
          %239 = sbr.rel (%p237) target = $region36
        $region35: #{tpu_custom_call.1} parent=31 // pred_region
          %240 = dma.done %s233, 64
        $region36: #{tpu_custom_call.1} parent=31 // pred_fallthru
          _
        %s241 = sand.u32 %s89, 1
        %s242 = scalar_lea.sflag [#allocation7], %s241
        %s243 = sand.u32 %s89, 1
        %s244 = smul.addr %s243, 16
        %s245 = scalar_lea.vmem [#allocation6], %s244
        // Predicated region
        $region37: #{tpu_custom_call.1} parent=31 // pred_check
          %p246 = pneg %p102
        $region38: #{tpu_custom_call.1} parent=31 // pred_check_branch
          %248 = sbr.rel (%p246) target = $region40
        $region39: #{tpu_custom_call.1} parent=31 // pred_region
          %249 = dma.done %s242, 256
        $region40: #{tpu_custom_call.1} parent=31 // pred_fallthru
          _
        %s250 = sand.u32 %s59, 1
        %s251 = scalar_lea.sflag [#allocation4], %s250
        %s252 = sand.u32 %s59, 1
        %s253 = smul.addr %s252, 4
        %s254 = scalar_lea.vmem [#allocation3], %s253
        %p255 = pneg %p72
        %p256 = pneg %p69
        %s257 = sand.u32 %s89, 1
        %s258 = scalar_lea.sflag [#allocation7], %s257
        %s259 = sand.u32 %s89, 1
        %s260 = smul.addr %s259, 16
        %s261 = scalar_lea.vmem [#allocation6], %s260
        %p262 = pneg %p102
        %p263 = pneg %p99
        %p264 = scmp.lt.s32.totalorder %s28, 0
        %s265 = scalar_select %p264, %s28, 0
        %s266 = scalar_lea.vmem %s2, %s265
        %p267 = pneg %p128
        %p268 = pneg %p125
        %p269 = pneg %p156
        %p270 = pneg %p153
        %s271 = smul.u32 4, %s30
        %p272 = scmp.lt.s32.totalorder %s28, 0
        %s273 = scalar_select %p272, %s28, 0
        %s274 = scalar_lea.vmem %s2, %s273
        %p276 = scmp.eq.s32.totalorder %s29, 0
        %p277 = scmp.eq.s32.totalorder %s29, 3
        %p278 = scmp.eq.s32.totalorder %s30, 0
        %p279 = pnand %p276, %p278
        %p280 = pneg %p279
        %p281 = pnand %p277, %p278
        %p282 = pneg %p281
        // Predicated region
        $region41: #{tpu_custom_call.1} parent=31 // pred_check
          _
        $region42: #{tpu_custom_call.1} parent=31 // pred_check_branch
          %284 = sbr.rel (%p279) target = $region44
        $region43: #{tpu_custom_call.1} parent=31 // pred_region
          %285 = vst [vmem:[#allocation2] sm:$0xff] 0.0
        $region44: #{tpu_custom_call.1} parent=31 // pred_fallthru
          _
        %v286 = vld [vmem:[#allocation2] sm:$0xff]
        %v287 = vld [vmem:[%s236] sm:$0xf]
        %v288 = vld [vmem:[%s245] sm:$0xf]
        %v289 = vld [vmem:[%s245 + $0x4] sm:$0xf]
        %v290 = vld [vmem:[%s245 + $0x8] sm:$0xf]
        %v291 = vld [vmem:[%s245 + $0xc] sm:$0xf]
        %v296 = vunpack.c.l.b16 %v288
        %v297 = vunpack.c.l.b16 %v289
        %v298 = vunpack.c.l.b16 %v290
        %v299 = vunpack.c.l.b16 %v291
        %v300 = vpack.c.b16 %v297, %v296
        %v301 = vpack.c.b16 %v299, %v298
        %vm304 = vcmask 261120
        %v306 = vsel %vm304, %v287, 0
        %308 = vmatprep.subr.bf16.mxu0 0
        %309 = vmatpush1.bf16.msra.mxu0 0
        %310 = vmatprep.subr.bf16.mxu0 0
        %311 = vmatpush1.bf16.msra.mxu0 0
        %312 = vmatprep.subr.bf16.mxu0 0
        %313 = vmatpush1.bf16.msra.mxu0 0
        %314 = vmatprep.subr.bf16.mxu0 0
        %315 = vmatpush1.bf16.msra.mxu0 0
        %316 = vmatprep.subr.bf16.mxu0 0
        %317 = vmatpush1.bf16.msra.mxu0 0
        %318 = vmatprep.subr.bf16.mxu0 0
        %319 = vmatpush1.bf16.msra.mxu0 0
        %320 = vmatprep.subr.bf16.mxu0 0
        %321 = vmatpush1.bf16.msra.mxu0 %v301
        %322 = vmatprep.subr.bf16.mxu0 0
        %323 = vmatpush1.bf16.msra.mxu0 %v300
        %324 = vmatprep.subr.bf16.mxu0 0
        %325 = vmatpush2.bf16.msra.mxu0 0
        %326 = vmatprep.subr.bf16.mxu0 0
        %327 = vmatpush2.bf16.msra.mxu0 0
        %328 = vmatprep.subr.bf16.mxu0 0
        %329 = vmatpush2.bf16.msra.mxu0 0
        %330 = vmatprep.subr.bf16.mxu0 0
        %331 = vmatpush2.bf16.msra.mxu0 0
        %332 = vmatprep.subr.bf16.mxu0 0
        %333 = vmatpush2.bf16.msra.mxu0 0
        %334 = vmatprep.subr.bf16.mxu0 0
        %335 = vmatpush2.bf16.msra.mxu0 0
        %336 = vmatprep.subr.bf16.mxu0 0
        %337 = vmatpush2.bf16.msra.mxu0 0
        %338 = vmatprep.subr.bf16.mxu0 0
        %339 = vmatpush2.bf16.msra.mxu0 0
        %340 = vmatprep.mubr.bf16.mxu0 0
        %341 = vmatmul.mubr.bf16.gmra.mxu0 %v306
        %v342 = vpop.f32.mrf.mxu0
        %v343 = vadd.f32 0.0, %v342
        %v344 = vpop.f32.mrf.mxu0
        %v345 = vpop.f32.mrf.mxu0
        %v346 = vpop.f32.mrf.mxu0
        %347 = vdwg.mxu0
        %v348 = vadd.f32 %v286, %v343
        %349 = vst [vmem:[#allocation2] sm:$0xff] %v348
        // Predicated region
        $region45: #{tpu_custom_call.1} parent=31 // pred_check
          _
        $region46: #{tpu_custom_call.1} parent=31 // pred_check_branch
          %351 = sbr.rel (%p281) target = $region48
        $region47: #{tpu_custom_call.1} parent=31 // pred_region
          %v352 = vld [vmem:[%s274] sm:$0x1]
          %v353 = vld [vmem:[#allocation2] sm:$0xff]
          %v355 = vlaneseq
          %v356 = vshrl.u32 %v355, 7
          %v357 = vsub.s32 0, %v356
          %v358 = vrot.slane %v352, %v357
          %v360 = vadd.f32 %v353, %v358
          %361 = vst [vmem:[#allocation8] sm:$0xff] %v360
        $region48: #{tpu_custom_call.1} parent=31 // pred_fallthru
          _
        // Predicated region
        $region49: #{tpu_custom_call.1} parent=31 // pred_check
          %p362 = pneg %p153
        $region50: #{tpu_custom_call.1} parent=31 // pred_check_branch
          %364 = sbr.rel (%p362) target = $region52
        $region51: #{tpu_custom_call.1} parent=31 // pred_region
          %s366 = ssub.s32 128, 128
          %367 = vsyncadd [#allocation5], %s366
          %s368 = sadd.s32 %s28, %s27
          %s369 = smul.addr %s368, 128
          %s370 = scalar_lea.hbm %s3, %s369
          %s372 = sshll.u32 [#allocation8], 4
          %s373 = int_to_ptr.vmem [resolvable:$true] %s372
          %375 = dma.vmem_to_hbm [thread:$0]  %s373, 128, %s370, [#allocation5]
        $region52: #{tpu_custom_call.1} parent=31 // pred_fallthru
          _
        // Predicated region
        $region53: #{tpu_custom_call.1} parent=31 // pred_check
          %p376 = pneg %p153
        $region54: #{tpu_custom_call.1} parent=31 // pred_check_branch
          %378 = sbr.rel (%p376) target = $region56
        $region55: #{tpu_custom_call.1} parent=31 // pred_region
          %379 = dma.done [#allocation5], 128
        $region56: #{tpu_custom_call.1} parent=31 // pred_fallthru
          _
      $region32: #{tpu_custom_call.1} parent=5 // pred_fallthru
        _
      %p380 = scmp.le.s32.totalorder 2, %s16
      // Predicated region
      $region57: #{tpu_custom_call.1} parent=5 // pred_check
        %p381 = pneg %p380
      $region58: #{tpu_custom_call.1} parent=5 // pred_check_branch
        %383 = sbr.rel (%p381) target = $region60
      $region59: #{tpu_custom_call.1} parent=5 // pred_region
        %s384 = ssub.s32 %s16, 2
      $region60: #{tpu_custom_call.1} parent=5 // pred_fallthru
        _
    $region6: #{tpu_custom_call.1} parent=1 // loop_footer
      %s20 = sadd.s32 1, %s16
    $region7: #{tpu_custom_call.1} parent=1 // loop_footer_branch
      %15 = sbr.rel target = $region3
    $region8: #{tpu_custom_call.1} parent=1 // loop_exit
      _
    %385 = vsyncpa [#allocation4], 1
    %s386 = scalar_lea.sflag [#allocation4], 1
    %387 = vsyncpa %s386, 1
    %388 = vsyncpa [#allocation7], 1
    %s389 = scalar_lea.sflag [#allocation7], 1
    %390 = vsyncpa %s389, 1
    %391 = vsyncpa [#allocation5], 1
    %s392 = scalar_lea.sflag [#allocation5], 1
    %393 = vsyncpa %s392, 1

</llo_original>
